<compile_context>
chip_gen: v5e
topology: v5e:2x2
jax: 0.10.0
libtpu: 0.0.40
codegen_flags: <defaults>
</compile_context>

<pallas_src>
import functools

import jax
import jax.numpy as jnp
from jax.experimental import pallas as pl
from jax.experimental.pallas import tpu as pltpu


# ----------------------- synthetic "processor" config -----------------------
TIME_SHIFT_STEPS      = 16
NOTE_RANGE            = 16
VELOCITY_BINS         = 8
NUM_PROGRAM_TOKENS    = 8
MAX_LOCAL_INSTRUMENTS = 4
CC_RANGE              = 8
PROGRAM_RANGE         = 8
DURATION_STEPS        = 16
NUM_EVENT_CATEGORIES  = 9
NUM_SPECIAL           = 3          # PAD=0, START=1, END=2
PAD_IDX               = 0
EMBED_DIM             = 32

# Global vocabulary layout (contiguous ranges, in vocab order).  The unified
# embedding table is stored in EXACTLY this order, so a valid global token id
# is directly its row in the table; everything else maps to the UNKNOWN row.
_VOCAB_ORDER = [
    ("SPECIAL",        NUM_SPECIAL),
    ("EVENT",          NUM_EVENT_CATEGORIES),
    ("TIME",           TIME_SHIFT_STEPS),
    ("NOTE",           NOTE_RANGE),
    ("VELOCITY",       VELOCITY_BINS),
    ("PROGRAM",        NUM_PROGRAM_TOKENS),
    ("LOCAL_INSTANCE", MAX_LOCAL_INSTRUMENTS),
    ("CC_NUM",         CC_RANGE),
    ("CC_VAL",         CC_RANGE),
    ("PROG_VAL",       PROGRAM_RANGE),
    ("DURATION",       DURATION_STEPS),
]
_VOCAB_START = {}
_off = 0
for _name, _sz in _VOCAB_ORDER:
    _VOCAB_START[_name] = _off
    _off += _sz
VOCAB_SIZE  = _off                 # ids in [0, VOCAB_SIZE) are valid
UNKNOWN_ROW = VOCAB_SIZE           # unknown_embed row appended after vocab
TABLE_ROWS  = VOCAB_SIZE + 1
V_PAD       = 128                  # lane-friendly padded row count
assert TABLE_ROWS <= V_PAD, "vocab grew past V_PAD; enlarge V_PAD"
assert 128 % EMBED_DIM == 0, "lane-dense packing assumes embed_dim divides 128"
PACK = 128 // EMBED_DIM            # tokens packed per output row (4 for D=32)


def _round_up(x, m):
    return -(-x // m) * m


# --------------------------------- kernel -----------------------------------
def _embed_kernel(ids_ref, table_ref, out_ref, *, vocab_size, unk_row, v_pad,
                  pack, precision):
    # ids_ref   : (TG, pack)            int32   (pack tokens per output row)
    # table_ref : (pack*v_pad, pack*D)  bf16/f32 block-diagonal table (invariant)
    # out_ref   : (TG, pack*D)          lane-dense output
    gid = ids_ref[...]                                      # (TG, pack)

    # Vocab-ordered dispatch: valid ids index the table directly; anything
    # outside [0, vocab_size) -> UNKNOWN row (2 compares + 1 select).
    valid = (gid >= 0) & (gid < vocab_size)
    row = jnp.where(valid, gid, unk_row)                    # (TG, pack)

    # Per-128-lane-block one-hot: one (TG, v_pad) lane iota, one compare + cast
    # per token slot, lane-aligned concat to (TG, pack*v_pad).  The
    # block-diagonal table then routes token j's embedding to output lanes
    # [j*D, (j+1)*D), so the final stores are full 128-lane wide.
    tg = gid.shape[0]
    lane = jax.lax.broadcasted_iota(jnp.int32, (tg, v_pad), 1)   # (TG, 128)
    tdt = table_ref.dtype
    onehot = jnp.concatenate(
        [(lane == row[:, j:j + 1]).astype(tdt) for j in range(pack)], axis=1)

    # One-hot gather on the MXU: (TG, pack*Vp) x (pack*Vp, pack*D) -> f32 acc.
    acc = jnp.dot(onehot, table_ref[...],
                  preferred_element_type=jnp.float32, precision=precision)
    out_ref[...] = acc.astype(out_ref.dtype)


# -------------------------------- wrapper ------------------------------------
def custom_token_embedding(input_ids, table_vocab, *,
                           compute_dtype=jnp.bfloat16,
                           out_dtype=jnp.float32,
                           tile_tokens=2048):
    """input_ids: (B, S) int, table_vocab: (V_PAD, D) f32 -> (B, S, D) out_dtype.

    compute_dtype=bfloat16: one-hot selection is exact; table values are
    bf16-rounded (standard practice).  compute_dtype=float32 keeps the table
    exact via a HIGHEST-precision matmul (bit-parity path, slower).
    out_dtype=bfloat16 halves HBM write traffic if the consumer tolerates it.
    """
    B, S = input_ids.shape
    Vp, D = table_vocab.shape
    pack = 128 // D

    # Block-diagonal table: copy j at (rows j*Vp.., lanes j*D..).  Small
    # (128 KiB bf16), built once, constant index_map keeps it VMEM-resident.
    tv = table_vocab.astype(compute_dtype)
    t4 = jnp.zeros((pack * Vp, pack * D), dtype=compute_dtype)
    for j in range(pack):
        t4 = t4.at[j * Vp:(j + 1) * Vp, j * D:(j + 1) * D].set(tv)

    # ---- token tiling -------------------------------------------------------
    n_tokens = B * S
    g_total = -(-n_tokens // pack)                      # token groups
    gpt_req = max(8, (tile_tokens // pack) // 8 * 8)    # requested groups/step
    if g_total <= 16:
        # Tiny input: one small, sublane-aligned step.
        gpt = _round_up(g_total, 8)
    else:
        # At least 2 grid steps so ("parallel",) can shard the token axis
        # across both v7x TensorCores, capped at the requested tile size.
        gpt = min(gpt_req, _round_up(-(-g_total // 2), 8))
    n_steps = -(-g_total // gpt)
    g_pad = n_steps * gpt
    n_pad = g_pad * pack

    ids_flat = input_ids.reshape(n_tokens).astype(jnp.int32)
    if n_pad > n_tokens:
        # Filler tokens get id 0 (PAD row -> zeros) and are sliced off below;
        # they never feed any in-kernel reduction.
        ids_flat = jnp.pad(ids_flat, (0, n_pad - n_tokens))
    ids2 = ids_flat.reshape(g_pad, pack)

    precision = (jax.lax.Precision.HIGHEST
                 if jnp.dtype(compute_dtype) == jnp.float32 else None)

    kernel = functools.partial(_embed_kernel, vocab_size=VOCAB_SIZE,
                               unk_row=UNKNOWN_ROW, v_pad=Vp, pack=pack,
                               precision=precision)
    out_packed = pl.pallas_call(
        kernel,
        out_shape=jax.ShapeDtypeStruct((g_pad, pack * D), out_dtype),
        grid=(n_steps,),
        in_specs=[
            pl.BlockSpec((gpt, pack), lambda g: (g, 0)),
            # Invariant operand (constant index_map -> no per-step re-DMA).
            # TODO(synk): pipeline_mode=pl.Buffered(1) could drop its redundant
            # second buffer (~128 KiB); left at the default for safety.
            pl.BlockSpec((pack * Vp, pack * D), lambda g: (0, 0)),
        ],
        out_specs=pl.BlockSpec((gpt, pack * D), lambda g: (g, 0)),
        compiler_params=pltpu.CompilerParams(
            dimension_semantics=("parallel",)),
    )(ids2, t4)

    # (g_pad, pack*D) row-major -> (g_pad*pack, D) recovers token order exactly.
    out_flat = out_packed.reshape(g_pad * pack, D)[:n_tokens]
    return out_flat.reshape(B, S, D)


# -------------------------- parameter construction --------------------------
def build_vocab_table(key, embed_dim=EMBED_DIM):
    """Unified table in vocab order, UNKNOWN row appended, padded to V_PAD."""
    keys = jax.random.split(key, len(_VOCAB_ORDER) + 1)
    parts = []
    for (name, size), k in zip(_VOCAB_ORDER, keys[:-1]):
        w = jax.random.normal(k, (size, embed_dim), dtype=jnp.float32)
        if name == "SPECIAL":
            w = w.at[0].set(0.0)   # nn.Embedding(padding_idx=0): PAD row zeros
        parts.append(w)
    parts.append(jax.random.normal(keys[-1], (1, embed_dim), dtype=jnp.float32))
    tbl = jnp.concatenate(parts, axis=0)                           # (TABLE_ROWS, D)
    pad = jnp.zeros((V_PAD - TABLE_ROWS, embed_dim), jnp.float32)
    return jnp.concatenate([tbl, pad], axis=0)                     # (V_PAD, D)


def reference_embedding(input_ids, table_vocab):
    """Pure-JAX reference mirroring the torch per-token dispatch."""
    gid = input_ids.astype(jnp.int32)
    row = jnp.where((gid >= 0) & (gid < VOCAB_SIZE), gid, UNKNOWN_ROW)
    return table_vocab[row]


# ---------------------------------- main -------------------------------------
if __name__ == "__main__":
    key = jax.random.PRNGKey(0)
    k_tab, k_ids1, k_ids2 = jax.random.split(key, 3)

    table_vocab = build_vocab_table(k_tab)
    compute_dtype = jnp.bfloat16
    # One-hot selection is exact in bf16; only table values get bf16-rounded,
    # so the reference uses the identically rounded table for a tight compare.
    table_used = table_vocab.astype(compute_dtype).astype(jnp.float32)

    # --- small shape matching the module (B=2, S=8): single grid step --------
    B, S = 2, 8
    ids = jax.random.randint(k_ids1, (B, S), 0, VOCAB_SIZE, dtype=jnp.int32)
    ids = ids.at[0, 0].set(PAD_IDX)          # PAD  -> zero row (padding_idx)
    ids = ids.at[0, 1].set(1)                # START
    ids = ids.at[1, 0].set(VOCAB_SIZE + 3)   # out-of-vocab -> unknown_embed
    ids = ids.at[1, 1].set(_VOCAB_START["DURATION"] + 2)

    out = custom_token_embedding(ids, table_vocab, compute_dtype=compute_dtype)
    out = jax.block_until_ready(out)
    assert out.shape == (B, S, EMBED_DIM) and out.dtype == jnp.float32
    assert jnp.allclose(out, reference_embedding(ids, table_used), atol=1e-6), \
        "mismatch vs reference (small case)"

    # --- odd-sized input: exercises multi-step grid + token padding ----------
    B2, S2 = 3, 173
    ids_b = jax.random.randint(k_ids2, (B2, S2), -2, VOCAB_SIZE + 5,
                               dtype=jnp.int32)       # includes invalid ids
    out_b = custom_token_embedding(ids_b, table_vocab, compute_dtype=compute_dtype)
    out_b = jax.block_until_ready(out_b)
    assert out_b.shape == (B2, S2, EMBED_DIM)
    assert jnp.allclose(out_b, reference_embedding(ids_b, table_used), atol=1e-6), \
        "mismatch vs reference (multi-step case)"

    print("KERNEL_OK")
</pallas_src>

<mosaic_0001>
module attributes {stable_mosaic.version = 11 : i64} {
  func.func @_embed_kernel(%arg0: i32, %arg1: memref<8x4xi32, #tpu.memory_space<vmem>>, %arg2: memref<512x128xbf16, #tpu.memory_space<vmem>>, %arg3: memref<8x128xf32, #tpu.memory_space<vmem>>) attributes {dimension_semantics = [#tpu.dimension_semantics<parallel>], iteration_bounds = array<i64: 1>, scalar_prefetch = 0 : i64, scratch_operands = 0 : i64, tpu.core_type = #tpu.core_type<tc>, window_params = [{transform_indices = @transform_0, window_bounds = array<i64: 8, 4>}, {pipeline_mode = #tpu.pipeline_mode<synchronous>, transform_indices = @transform_1, window_bounds = array<i64: 512, 128>}, {transform_indices = @transform_2, window_bounds = array<i64: 8, 128>}]} {
    %c0 = arith.constant 0 : index
    %c0_0 = arith.constant 0 : index
    %0 = vector.load %arg1[%c0, %c0_0] : memref<8x4xi32, #tpu.memory_space<vmem>>, vector<8x4xi32>
    %c0_i32 = arith.constant 0 : i32
    %1 = vector.broadcast %c0_i32 : i32 to vector<8x4xi32>
    %2 = arith.cmpi sge, %0, %1 : vector<8x4xi32>
    %c104_i32 = arith.constant 104 : i32
    %3 = vector.broadcast %c104_i32 : i32 to vector<8x4xi32>
    %4 = arith.cmpi slt, %0, %3 : vector<8x4xi32>
    %5 = arith.andi %2, %4 : vector<8x4xi1>
    %c104_i32_1 = arith.constant 104 : i32
    %6 = vector.broadcast %c104_i32_1 : i32 to vector<8x4xi32>
    %7 = arith.select %5, %0, %6 : vector<8x4xi1>, vector<8x4xi32>
    %8 = tpu.iota {dimensions = array<i32: 1>} : vector<8x128xi32>
    %9 = vector.extract_strided_slice %7 {offsets = [0, 0], sizes = [8, 1], strides = [1, 1]} : vector<8x4xi32> to vector<8x1xi32>
    %10 = vector.broadcast %9 : vector<8x1xi32> to vector<8x128xi32>
    %11 = arith.cmpi eq, %8, %10 : vector<8x128xi32>
    %12 = arith.extui %11 : vector<8x128xi1> to vector<8x128xi32>
    %13 = arith.sitofp %12 : vector<8x128xi32> to vector<8x128xf32>
    %14 = arith.truncf %13 : vector<8x128xf32> to vector<8x128xbf16>
    %15 = vector.extract_strided_slice %7 {offsets = [0, 1], sizes = [8, 1], strides = [1, 1]} : vector<8x4xi32> to vector<8x1xi32>
    %16 = vector.broadcast %15 : vector<8x1xi32> to vector<8x128xi32>
    %17 = arith.cmpi eq, %8, %16 : vector<8x128xi32>
    %18 = arith.extui %17 : vector<8x128xi1> to vector<8x128xi32>
    %19 = arith.sitofp %18 : vector<8x128xi32> to vector<8x128xf32>
    %20 = arith.truncf %19 : vector<8x128xf32> to vector<8x128xbf16>
    %21 = vector.extract_strided_slice %7 {offsets = [0, 2], sizes = [8, 1], strides = [1, 1]} : vector<8x4xi32> to vector<8x1xi32>
    %22 = vector.broadcast %21 : vector<8x1xi32> to vector<8x128xi32>
    %23 = arith.cmpi eq, %8, %22 : vector<8x128xi32>
    %24 = arith.extui %23 : vector<8x128xi1> to vector<8x128xi32>
    %25 = arith.sitofp %24 : vector<8x128xi32> to vector<8x128xf32>
    %26 = arith.truncf %25 : vector<8x128xf32> to vector<8x128xbf16>
    %27 = vector.extract_strided_slice %7 {offsets = [0, 3], sizes = [8, 1], strides = [1, 1]} : vector<8x4xi32> to vector<8x1xi32>
    %28 = vector.broadcast %27 : vector<8x1xi32> to vector<8x128xi32>
    %29 = arith.cmpi eq, %8, %28 : vector<8x128xi32>
    %30 = arith.extui %29 : vector<8x128xi1> to vector<8x128xi32>
    %31 = arith.sitofp %30 : vector<8x128xi32> to vector<8x128xf32>
    %32 = arith.truncf %31 : vector<8x128xf32> to vector<8x128xbf16>
    %33 = tpu.concatenate %14, %20, %26, %32 in 1 : vector<8x128xbf16>, vector<8x128xbf16>, vector<8x128xbf16>, vector<8x128xbf16> -> vector<8x512xbf16>
    %c0_2 = arith.constant 0 : index
    %c0_3 = arith.constant 0 : index
    %34 = vector.load %arg2[%c0_2, %c0_3] : memref<512x128xbf16, #tpu.memory_space<vmem>>, vector<512x128xbf16>
    %cst = arith.constant dense<0.000000e+00> : vector<8x128xf32>
    %35 = tpu.matmul %33, %34, %cst {dimension_numbers = #tpu.dot_dimension_numbers<[1], [0], [0], [1], [0, 0, 1, 1], [], []>} : vector<8x512xbf16>, vector<512x128xbf16>, vector<8x128xf32> -> vector<8x128xf32>
    %c0_4 = arith.constant 0 : index
    %c0_5 = arith.constant 0 : index
    %36 = vector.load %arg3[%c0_4, %c0_5] : memref<8x128xf32, #tpu.memory_space<vmem>>, vector<8x128xf32>
    tpu.vector_store %arg3[%c0_4, %c0_5], %35 {strides = array<i32>} : memref<8x128xf32, #tpu.memory_space<vmem>>, vector<8x128xf32>,
    return
  }
  func.func @transform_0(%arg0: i32) -> (i32, i32) {
    %c0_i32 = arith.constant 0 : i32
    %c0_i32_0 = arith.constant 0 : i32
    return %arg0, %c0_i32 : i32, i32
  }
  func.func @transform_1(%arg0: i32) -> (i32, i32) {
    %c0_i32 = arith.constant 0 : i32
    %c0_i32_0 = arith.constant 0 : i32
    %c0_i32_1 = arith.constant 0 : i32
    return %c0_i32, %c0_i32_0 : i32, i32
  }
  func.func @transform_2(%arg0: i32) -> (i32, i32) {
    %c0_i32 = arith.constant 0 : i32
    %c0_i32_0 = arith.constant 0 : i32
    return %arg0, %c0_i32 : i32, i32
  }
}

</mosaic_0001>

<llo_original>
// kernel: tpu_custom_call.1
$region0: #{tpu_custom_call.1}
  #allocation0 [shape = 'u32[]', space=smem, size = 0x4, offset = 0x4, fixed_abs, tag = 'smem constant byte address 0x4 - core index']
  #allocation1 [shape = 'u32[72,128]{1,0:T(1,128)}', space=vmem, size = 0x9000, scoped, tag = 'internal scratch']
  %s0 = inlined_call_operand.vmem [shape: s32[8,4], index: 0, kind: input, shape index: {}]
  %s1 = inlined_call_operand.hbm [shape: bf16[512,128], index: 1, kind: input, shape index: {}]
  %s2 = inlined_call_operand.hbm [shape: f32[8,128], index: 2, kind: output, shape index: {}]
  %s3 = sld [smem:[#allocation0]]
  $region22: #{tpu_custom_call.1} parent=0
    _
  %s5 = ssub.s32 1, %s3
  %s6 = scalar_select 0, %s5, %s3
  $region1: #{tpu_custom_call.1} parent=0
    #allocation2 [shape = 'u8[131072]{0}', space=vmem, size = 0x20000, scoped, tag = 'input window, operand 1, single buffered']
    #allocation3 [shape = 's32[1]{0}', space=sflag, size = 0x4, scoped, tag = 'scoped memory for tpu_custom_call.1']
    #allocation4 [shape = 's32[1]{0}', space=sflag, size = 0x4, scoped, tag = 'scoped memory for tpu_custom_call.1']
    #allocation5 [shape = 'u8[4096]{0}', space=vmem, size = 0x1000, scoped, tag = 'output window, operand 0, single buffered']
    %7 = vsyncpa [#allocation3], 0
    %8 = vsyncpa [#allocation4], 0
    // Predicated region
    $region2: #{tpu_custom_call.1} parent=1 // pred_check
      _
    $region3: #{tpu_custom_call.1} parent=1 // pred_check_branch
      %10 = sbr.rel (0) target = $region5
    $region4: #{tpu_custom_call.1} parent=1 // pred_region
      _
    $region5: #{tpu_custom_call.1} parent=1 // pred_fallthru
      _
    // Predicated region
    $region6: #{tpu_custom_call.1} parent=1 // pred_check
      _
    $region7: #{tpu_custom_call.1} parent=1 // pred_check_branch
      %12 = sbr.rel (0) target = $region9
    $region8: #{tpu_custom_call.1} parent=1 // pred_region
      %14 = vsyncadd [#allocation3], 0
      %s15 = sshll.u32 %s1, 4
      %s16 = int_to_ptr.hbm [resolvable:$true] %s15
      %s17 = sshll.u32 [#allocation2], 4
      %s18 = int_to_ptr.vmem [resolvable:$true] %s17
      %23 = dma.hbm_to_vmem [thread:$0]  %s16, 4096, %s18, [#allocation3], 64, 64, 4
    $region9: #{tpu_custom_call.1} parent=1 // pred_fallthru
      _
    // Predicated region
    $region10: #{tpu_custom_call.1} parent=1 // pred_check
      _
    $region11: #{tpu_custom_call.1} parent=1 // pred_check_branch
      %25 = sbr.rel (0) target = $region13
    $region12: #{tpu_custom_call.1} parent=1 // pred_region
      %27 = dma.done [#allocation3], 4096
    $region13: #{tpu_custom_call.1} parent=1 // pred_fallthru
      _
    %v28 = vld [vmem:[%s0] sm:$0xff]
    %vm29 = vcmp.ge.s32.totalorder %v28, 0
    %vm30 = vcmp.lt.s32.totalorder %v28, 104
    %vm31 = vmand %vm29, %vm30
    %v32 = vsel %vm31, %v28, 104
    %v33 = vlaneseq
    %v34 = vand.u32 %v33, 127
    %35 = vset.pattern.permute.xlu0 0
    %36 = vperm.xlu0 %35, %v32
    %v37 = vpop.permute.xlu0 %36
    %vm38 = vcmp.eq.s32.totalorder %v34, %v37
    %v39 = vsel %vm38, 1, 0
    %v40 = vcvt.s32.f32 %v39
    %v41 = vpack.c.bf16 %v40, %v40
    %42 = vset.pattern.permute.xlu0 1
    %43 = vperm.xlu0 %42, %v32
    %v44 = vpop.permute.xlu0 %43
    %vm45 = vcmp.eq.s32.totalorder %v34, %v44
    %v46 = vsel %vm45, 1, 0
    %v47 = vcvt.s32.f32 %v46
    %v48 = vpack.c.bf16 %v47, %v47
    %49 = vset.pattern.permute.xlu0 2
    %50 = vperm.xlu0 %49, %v32
    %v51 = vpop.permute.xlu0 %50
    %vm52 = vcmp.eq.s32.totalorder %v34, %v51
    %v53 = vsel %vm52, 1, 0
    %v54 = vcvt.s32.f32 %v53
    %v55 = vpack.c.bf16 %v54, %v54
    %56 = vset.pattern.permute.xlu0 3
    %57 = vperm.xlu0 %56, %v32
    %v58 = vpop.permute.xlu0 %57
    %vm59 = vcmp.eq.s32.totalorder %v34, %v58
    %v60 = vsel %vm59, 1, 0
    %v61 = vcvt.s32.f32 %v60
    %v62 = vpack.c.bf16 %v61, %v61
    %v63 = vld [vmem:[#allocation2] sm:$0xf]
    %v64 = vld [vmem:[#allocation2 + $0x4] sm:$0xf]
    %v65 = vld [vmem:[#allocation2 + $0x8] sm:$0xf]
    %v66 = vld [vmem:[#allocation2 + $0xc] sm:$0xf]
    %v67 = vld [vmem:[#allocation2 + $0x10] sm:$0xf]
    %v68 = vld [vmem:[#allocation2 + $0x14] sm:$0xf]
    %v69 = vld [vmem:[#allocation2 + $0x18] sm:$0xf]
    %v70 = vld [vmem:[#allocation2 + $0x1c] sm:$0xf]
    %v71 = vld [vmem:[#allocation2 + $0x20] sm:$0xf]
    %v72 = vld [vmem:[#allocation2 + $0x24] sm:$0xf]
    %v73 = vld [vmem:[#allocation2 + $0x28] sm:$0xf]
    %v74 = vld [vmem:[#allocation2 + $0x2c] sm:$0xf]
    %v75 = vld [vmem:[#allocation2 + $0x30] sm:$0xf]
    %v76 = vld [vmem:[#allocation2 + $0x34] sm:$0xf]
    %v77 = vld [vmem:[#allocation2 + $0x38] sm:$0xf]
    %v78 = vld [vmem:[#allocation2 + $0x3c] sm:$0xf]
    %v79 = vld [vmem:[#allocation2 + $0x40] sm:$0xf]
    %v80 = vld [vmem:[#allocation2 + $0x44] sm:$0xf]
    %v81 = vld [vmem:[#allocation2 + $0x48] sm:$0xf]
    %v82 = vld [vmem:[#allocation2 + $0x4c] sm:$0xf]
    %v83 = vld [vmem:[#allocation2 + $0x50] sm:$0xf]
    %v84 = vld [vmem:[#allocation2 + $0x54] sm:$0xf]
    %v85 = vld [vmem:[#allocation2 + $0x58] sm:$0xf]
    %v86 = vld [vmem:[#allocation2 + $0x5c] sm:$0xf]
    %v87 = vld [vmem:[#allocation2 + $0x60] sm:$0xf]
    %v88 = vld [vmem:[#allocation2 + $0x64] sm:$0xf]
    %v89 = vld [vmem:[#allocation2 + $0x68] sm:$0xf]
    %v90 = vld [vmem:[#allocation2 + $0x6c] sm:$0xf]
    %v91 = vld [vmem:[#allocation2 + $0x70] sm:$0xf]
    %v92 = vld [vmem:[#allocation2 + $0x74] sm:$0xf]
    %v93 = vld [vmem:[#allocation2 + $0x78] sm:$0xf]
    %v94 = vld [vmem:[#allocation2 + $0x7c] sm:$0xf]
    %v95 = vld [vmem:[#allocation2 + $0x80] sm:$0xf]
    %v96 = vld [vmem:[#allocation2 + $0x84] sm:$0xf]
    %v97 = vld [vmem:[#allocation2 + $0x88] sm:$0xf]
    %v98 = vld [vmem:[#allocation2 + $0x8c] sm:$0xf]
    %v99 = vld [vmem:[#allocation2 + $0x90] sm:$0xf]
    %v100 = vld [vmem:[#allocation2 + $0x94] sm:$0xf]
    %v101 = vld [vmem:[#allocation2 + $0x98] sm:$0xf]
    %v102 = vld [vmem:[#allocation2 + $0x9c] sm:$0xf]
    %v103 = vld [vmem:[#allocation2 + $0xa0] sm:$0xf]
    %v104 = vld [vmem:[#allocation2 + $0xa4] sm:$0xf]
    %v105 = vld [vmem:[#allocation2 + $0xa8] sm:$0xf]
    %v106 = vld [vmem:[#allocation2 + $0xac] sm:$0xf]
    %v107 = vld [vmem:[#allocation2 + $0xb0] sm:$0xf]
    %v108 = vld [vmem:[#allocation2 + $0xb4] sm:$0xf]
    %v109 = vld [vmem:[#allocation2 + $0xb8] sm:$0xf]
    %v110 = vld [vmem:[#allocation2 + $0xbc] sm:$0xf]
    %v111 = vld [vmem:[#allocation2 + $0xc0] sm:$0xf]
    %v112 = vld [vmem:[#allocation2 + $0xc4] sm:$0xf]
    %v113 = vld [vmem:[#allocation2 + $0xc8] sm:$0xf]
    %v114 = vld [vmem:[#allocation2 + $0xcc] sm:$0xf]
    %v115 = vld [vmem:[#allocation2 + $0xd0] sm:$0xf]
    %v116 = vld [vmem:[#allocation2 + $0xd4] sm:$0xf]
    %v117 = vld [vmem:[#allocation2 + $0xd8] sm:$0xf]
    %v118 = vld [vmem:[#allocation2 + $0xdc] sm:$0xf]
    %v119 = vld [vmem:[#allocation2 + $0xe0] sm:$0xf]
    %v120 = vld [vmem:[#allocation2 + $0xe4] sm:$0xf]
    %v121 = vld [vmem:[#allocation2 + $0xe8] sm:$0xf]
    %v122 = vld [vmem:[#allocation2 + $0xec] sm:$0xf]
    %v123 = vld [vmem:[#allocation2 + $0xf0] sm:$0xf]
    %v124 = vld [vmem:[#allocation2 + $0xf4] sm:$0xf]
    %v125 = vld [vmem:[#allocation2 + $0xf8] sm:$0xf]
    %v126 = vld [vmem:[#allocation2 + $0xfc] sm:$0xf]
    %v191 = vunpack.c.l.b16 %v63
    %v192 = vunpack.c.l.b16 %v64
    %v193 = vunpack.c.l.b16 %v65
    %v194 = vunpack.c.l.b16 %v66
    %v195 = vunpack.c.l.b16 %v67
    %v196 = vunpack.c.l.b16 %v68
    %v197 = vunpack.c.l.b16 %v69
    %v198 = vunpack.c.l.b16 %v70
    %v199 = vunpack.c.l.b16 %v71
    %v200 = vunpack.c.l.b16 %v72
    %v201 = vunpack.c.l.b16 %v73
    %v202 = vunpack.c.l.b16 %v74
    %v203 = vunpack.c.l.b16 %v75
    %v204 = vunpack.c.l.b16 %v76
    %v205 = vunpack.c.l.b16 %v77
    %v206 = vunpack.c.l.b16 %v78
    %v207 = vunpack.c.l.b16 %v79
    %v208 = vunpack.c.l.b16 %v80
    %v209 = vunpack.c.l.b16 %v81
    %v210 = vunpack.c.l.b16 %v82
    %v211 = vunpack.c.l.b16 %v83
    %v212 = vunpack.c.l.b16 %v84
    %v213 = vunpack.c.l.b16 %v85
    %v214 = vunpack.c.l.b16 %v86
    %v215 = vunpack.c.l.b16 %v87
    %v216 = vunpack.c.l.b16 %v88
    %v217 = vunpack.c.l.b16 %v89
    %v218 = vunpack.c.l.b16 %v90
    %v219 = vunpack.c.l.b16 %v91
    %v220 = vunpack.c.l.b16 %v92
    %v221 = vunpack.c.l.b16 %v93
    %v222 = vunpack.c.l.b16 %v94
    %v223 = vunpack.c.l.b16 %v95
    %v224 = vunpack.c.l.b16 %v96
    %v225 = vunpack.c.l.b16 %v97
    %v226 = vunpack.c.l.b16 %v98
    %v227 = vunpack.c.l.b16 %v99
    %v228 = vunpack.c.l.b16 %v100
    %v229 = vunpack.c.l.b16 %v101
    %v230 = vunpack.c.l.b16 %v102
    %v231 = vunpack.c.l.b16 %v103
    %v232 = vunpack.c.l.b16 %v104
    %v233 = vunpack.c.l.b16 %v105
    %v234 = vunpack.c.l.b16 %v106
    %v235 = vunpack.c.l.b16 %v107
    %v236 = vunpack.c.l.b16 %v108
    %v237 = vunpack.c.l.b16 %v109
    %v238 = vunpack.c.l.b16 %v110
    %v239 = vunpack.c.l.b16 %v111
    %v240 = vunpack.c.l.b16 %v112
    %v241 = vunpack.c.l.b16 %v113
    %v242 = vunpack.c.l.b16 %v114
    %v243 = vunpack.c.l.b16 %v115
    %v244 = vunpack.c.l.b16 %v116
    %v245 = vunpack.c.l.b16 %v117
    %v246 = vunpack.c.l.b16 %v118
    %v247 = vunpack.c.l.b16 %v119
    %v248 = vunpack.c.l.b16 %v120
    %v249 = vunpack.c.l.b16 %v121
    %v250 = vunpack.c.l.b16 %v122
    %v251 = vunpack.c.l.b16 %v123
    %v252 = vunpack.c.l.b16 %v124
    %v253 = vunpack.c.l.b16 %v125
    %v254 = vunpack.c.l.b16 %v126
    %v255 = vpack.c.b16 %v192, %v191
    %v256 = vpack.c.b16 %v194, %v193
    %v257 = vpack.c.b16 %v196, %v195
    %v258 = vpack.c.b16 %v198, %v197
    %v259 = vpack.c.b16 %v200, %v199
    %v260 = vpack.c.b16 %v202, %v201
    %v261 = vpack.c.b16 %v204, %v203
    %v262 = vpack.c.b16 %v206, %v205
    %v263 = vpack.c.b16 %v208, %v207
    %v264 = vpack.c.b16 %v210, %v209
    %v265 = vpack.c.b16 %v212, %v211
    %v266 = vpack.c.b16 %v214, %v213
    %v267 = vpack.c.b16 %v216, %v215
    %v268 = vpack.c.b16 %v218, %v217
    %v269 = vpack.c.b16 %v220, %v219
    %v270 = vpack.c.b16 %v222, %v221
    %v271 = vpack.c.b16 %v224, %v223
    %v272 = vpack.c.b16 %v226, %v225
    %v273 = vpack.c.b16 %v228, %v227
    %v274 = vpack.c.b16 %v230, %v229
    %v275 = vpack.c.b16 %v232, %v231
    %v276 = vpack.c.b16 %v234, %v233
    %v277 = vpack.c.b16 %v236, %v235
    %v278 = vpack.c.b16 %v238, %v237
    %v279 = vpack.c.b16 %v240, %v239
    %v280 = vpack.c.b16 %v242, %v241
    %v281 = vpack.c.b16 %v244, %v243
    %v282 = vpack.c.b16 %v246, %v245
    %v283 = vpack.c.b16 %v248, %v247
    %v284 = vpack.c.b16 %v250, %v249
    %v285 = vpack.c.b16 %v252, %v251
    %v286 = vpack.c.b16 %v254, %v253
    %319 = vmatpush.bf16.msra.mxu0 %v262
    %320 = vmatpush.bf16.msra.mxu0 %v261
    %321 = vmatpush.bf16.msra.mxu0 %v260
    %322 = vmatpush.bf16.msra.mxu0 %v259
    %323 = vmatpush.bf16.msra.mxu0 %v258
    %324 = vmatpush.bf16.msra.mxu0 %v257
    %325 = vmatpush.bf16.msra.mxu0 %v256
    %326 = vmatpush.bf16.msra.mxu0 %v255
    %327 = vmatmul.bf16.gmra.mxu0 %v41
    %v328 = vpop.f32.mrf.mxu0
    %v329 = vadd.f32 0.0, %v328
    %v330 = vpop.f32.mrf.mxu0
    %331 = vdwg.mxu0
    %332 = vmatpush.bf16.msra.mxu0 %v270
    %333 = vmatpush.bf16.msra.mxu0 %v269
    %334 = vmatpush.bf16.msra.mxu0 %v268
    %335 = vmatpush.bf16.msra.mxu0 %v267
    %336 = vmatpush.bf16.msra.mxu0 %v266
    %337 = vmatpush.bf16.msra.mxu0 %v265
    %338 = vmatpush.bf16.msra.mxu0 %v264
    %339 = vmatpush.bf16.msra.mxu0 %v263
    %340 = vmatmul.bf16.gmra.mxu0 %v48
    %v341 = vpop.f32.mrf.mxu0
    %v342 = vadd.f32 %v329, %v341
    %v343 = vpop.f32.mrf.mxu0
    %344 = vdwg.mxu0
    %345 = vmatpush.bf16.msra.mxu0 %v278
    %346 = vmatpush.bf16.msra.mxu0 %v277
    %347 = vmatpush.bf16.msra.mxu0 %v276
    %348 = vmatpush.bf16.msra.mxu0 %v275
    %349 = vmatpush.bf16.msra.mxu0 %v274
    %350 = vmatpush.bf16.msra.mxu0 %v273
    %351 = vmatpush.bf16.msra.mxu0 %v272
    %352 = vmatpush.bf16.msra.mxu0 %v271
    %353 = vmatmul.bf16.gmra.mxu0 %v55
    %v354 = vpop.f32.mrf.mxu0
    %v355 = vadd.f32 %v342, %v354
    %v356 = vpop.f32.mrf.mxu0
    %357 = vdwg.mxu0
    %358 = vmatpush.bf16.msra.mxu0 %v286
    %359 = vmatpush.bf16.msra.mxu0 %v285
    %360 = vmatpush.bf16.msra.mxu0 %v284
    %361 = vmatpush.bf16.msra.mxu0 %v283
    %362 = vmatpush.bf16.msra.mxu0 %v282
    %363 = vmatpush.bf16.msra.mxu0 %v281
    %364 = vmatpush.bf16.msra.mxu0 %v280
    %365 = vmatpush.bf16.msra.mxu0 %v279
    %366 = vmatmul.bf16.gmra.mxu0 %v62
    %v367 = vpop.f32.mrf.mxu0
    %v368 = vadd.f32 %v355, %v367
    %v369 = vpop.f32.mrf.mxu0
    %370 = vdwg.mxu0
    %371 = vst [vmem:[#allocation5] sm:$0xff] %v368
    // Predicated region
    $region14: #{tpu_custom_call.1} parent=1 // pred_check
      _
    $region15: #{tpu_custom_call.1} parent=1 // pred_check_branch
      %373 = sbr.rel (0) target = $region17
    $region16: #{tpu_custom_call.1} parent=1 // pred_region
      %375 = vsyncadd [#allocation4], 0
      %s377 = sshll.u32 [#allocation5], 4
      %s378 = int_to_ptr.vmem [resolvable:$true] %s377
      %s379 = sshll.u32 %s2, 4
      %s380 = int_to_ptr.hbm [resolvable:$true] %s379
      %382 = dma.vmem_to_hbm [thread:$0]  %s378, 128, %s380, [#allocation4]
    $region17: #{tpu_custom_call.1} parent=1 // pred_fallthru
      _
    // Predicated region
    $region18: #{tpu_custom_call.1} parent=1 // pred_check
      _
    $region19: #{tpu_custom_call.1} parent=1 // pred_check_branch
      %384 = sbr.rel (0) target = $region21
    $region20: #{tpu_custom_call.1} parent=1 // pred_region
      %386 = dma.done [#allocation4], 128
    $region21: #{tpu_custom_call.1} parent=1 // pred_fallthru
      _
    %387 = vsyncpa [#allocation3], 1
    %388 = vsyncpa [#allocation4], 1

</llo_original>
